<compile_context>
chip_gen: v6e
topology: v6e:2x2x1
jax: 0.10.0
libtpu: 0.0.40
codegen_flags: <defaults>
</compile_context>

<pallas_src>
import functools
import math

import jax
import jax.numpy as jnp
from jax.experimental import pallas as pl
from jax.experimental.pallas import tpu as pltpu


def _siren_kernel(x_ref, w_ref, b_ref, o_ref, *, w0):
    # x_ref: (tile_m, K)  w_ref: (K, N)  b_ref: (1, N)  o_ref: (tile_m, N)
    acc = jnp.dot(x_ref[...], w_ref[...], preferred_element_type=jnp.float32)
    acc = acc + b_ref[...].astype(jnp.float32)
    o_ref[...] = jnp.sin(w0 * acc).astype(o_ref.dtype)


def _sublane_multiple(dtype):
    itemsize = jnp.dtype(dtype).itemsize
    return {4: 8, 2: 16, 1: 32}.get(itemsize, 8)


@functools.partial(jax.jit, static_argnames=("w0",))
def siren_forward(x, weight, bias=None, w0=1.0):
    """Pallas TPU implementation of Siren.forward: sin(w0 * (x @ weight.T + bias))."""
    orig_shape = x.shape
    N, K = weight.shape  # (dim_out, dim_in)
    assert orig_shape[-1] == K

    # Flatten all leading dims into matmul rows.
    x2 = x.reshape(-1, K)
    M = x2.shape[0]

    # Keep I/O in the input dtype (e.g. bf16 stays bf16 on the wire; upcast only
    # inside the kernel via the f32 accumulator).
    w_t = weight.astype(x.dtype).T                    # (K, N): lane-dense over dim_out
    if bias is None:
        b2 = jnp.zeros((1, N), dtype=x.dtype)
    else:
        b2 = bias.astype(x.dtype).reshape(1, N)

    # Row-tile selection: byte budget, dtype-aware sublane multiple, >= 2 grid
    # steps when possible (megacore sharding on v7x).
    sub = _sublane_multiple(x.dtype)
    budget_bytes = 2 * 1024 * 1024
    bytes_per_row = (K + N) * 4                        # f32-equivalent, conservative
    tile_cap = max(sub, (budget_bytes // max(bytes_per_row, 1)) // sub * sub)
    half_rows = -(-max(M, 1) // 2)                     # cdiv(M, 2)
    half_rows = -(-half_rows // sub) * sub             # round up to sublane multiple
    tile_m = max(sub, min(tile_cap, half_rows))

    # Pad only the tail row block (no-op when M already divides tile_m).
    Mp = -(-max(M, 1) // tile_m) * tile_m
    if Mp != M:
        x2 = jnp.pad(x2, ((0, Mp - M), (0, 0)))

    grid = (Mp // tile_m,)

    # TODO(synk): add K/N grid tiling with an f32 accumulator scratch for very
    # large dim_in/dim_out where W^T would not fit in VMEM (not needed for
    # typical SIREN layer widths).
    out = pl.pallas_call(
        functools.partial(_siren_kernel, w0=float(w0)),
        out_shape=jax.ShapeDtypeStruct((Mp, N), x.dtype),
        grid=grid,
        in_specs=[
            pl.BlockSpec((tile_m, K), lambda i: (i, 0)),   # x row tile (pipelined)
            pl.BlockSpec((K, N), lambda i: (0, 0)),        # resident W^T
            pl.BlockSpec((1, N), lambda i: (0, 0)),        # resident bias
        ],
        out_specs=pl.BlockSpec((tile_m, N), lambda i: (i, 0)),
        compiler_params=pltpu.CompilerParams(
            dimension_semantics=("parallel",),
        ),
    )(x2, w_t, b2)

    if Mp != M:
        out = out[:M]
    return out.reshape(orig_shape[:-1] + (N,))


if __name__ == "__main__":
    key = jax.random.PRNGKey(0)
    k_x, k_w, k_b = jax.random.split(key, 3)

    # Small Siren layer consistent with the module: first layer, dim_in=32,
    # dim_out=32, w0=30 (typical SIREN), inputs (batch=2, seq=8, dim_in).
    batch, seq, dim_in, dim_out = 2, 8, 32, 32
    w0, c, is_first = 30.0, 6.0, True
    w_std = (1.0 / dim_in) if is_first else (math.sqrt(c / dim_in) / w0)

    def _q(a):
        # Snap values to bf16-representable f32 so the MXU precision path of the
        # kernel and the XLA reference agree to f32 rounding in the test.
        return a.astype(jnp.bfloat16).astype(jnp.float32)

    x = _q(jax.random.normal(k_x, (batch, seq, dim_in), dtype=jnp.float32))
    weight = _q(jax.random.uniform(k_w, (dim_out, dim_in), jnp.float32,
                                   minval=-w_std, maxval=w_std))
    bias = _q(jax.random.uniform(k_b, (dim_out,), jnp.float32,
                                 minval=-w_std, maxval=w_std))

    y = siren_forward(x, weight, bias, w0=w0)
    y = jax.block_until_ready(y)

    # Reference: F.linear(x, W, b) followed by sin(w0 * .).
    y_ref = jnp.sin(
        w0 * (jnp.einsum("bsk,nk->bsn", x, weight,
                         precision=jax.lax.Precision.HIGHEST) + bias)
    )
    assert y.shape == y_ref.shape and y.dtype == x.dtype
    err = float(jnp.max(jnp.abs(y - y_ref)))
    assert jnp.allclose(y, y_ref, atol=1e-4, rtol=1e-4), err

    print("KERNEL_OK")
</pallas_src>

<mosaic_0001>
module attributes {stable_mosaic.version = 11 : i64} {
  func.func @_siren_kernel(%arg0: i32, %arg1: memref<8x32xf32, #tpu.memory_space<vmem>>, %arg2: memref<32x32xf32, #tpu.memory_space<vmem>>, %arg3: memref<1x32xf32, #tpu.memory_space<vmem>>, %arg4: memref<8x32xf32, #tpu.memory_space<vmem>>) attributes {dimension_semantics = [#tpu.dimension_semantics<parallel>], iteration_bounds = array<i64: 2>, scalar_prefetch = 0 : i64, scratch_operands = 0 : i64, tpu.core_type = #tpu.core_type<tc>, window_params = [{transform_indices = @transform_0, window_bounds = array<i64: 8, 32>}, {pipeline_mode = #tpu.pipeline_mode<synchronous>, transform_indices = @transform_1, window_bounds = array<i64: 32, 32>}, {pipeline_mode = #tpu.pipeline_mode<synchronous>, transform_indices = @transform_2, window_bounds = array<i64: 1, 32>}, {transform_indices = @transform_3, window_bounds = array<i64: 8, 32>}]} {
    %c0 = arith.constant 0 : index
    %c0_0 = arith.constant 0 : index
    %0 = vector.load %arg1[%c0, %c0_0] : memref<8x32xf32, #tpu.memory_space<vmem>>, vector<8x32xf32>
    %c0_1 = arith.constant 0 : index
    %c0_2 = arith.constant 0 : index
    %1 = vector.load %arg2[%c0_1, %c0_2] : memref<32x32xf32, #tpu.memory_space<vmem>>, vector<32x32xf32>
    %cst = arith.constant dense<0.000000e+00> : vector<8x32xf32>
    %2 = tpu.matmul %0, %1, %cst {dimension_numbers = #tpu.dot_dimension_numbers<[1], [0], [0], [1], [0, 0, 1, 1], [], []>} : vector<8x32xf32>, vector<32x32xf32>, vector<8x32xf32> -> vector<8x32xf32>
    %c0_3 = arith.constant 0 : index
    %c0_4 = arith.constant 0 : index
    %3 = vector.load %arg3[%c0_3, %c0_4] : memref<1x32xf32, #tpu.memory_space<vmem>>, vector<1x32xf32>
    %4 = vector.broadcast %3 : vector<1x32xf32> to vector<8x32xf32>
    %5 = arith.addf %2, %4 : vector<8x32xf32>
    %cst_5 = arith.constant 3.000000e+01 : f32
    %6 = vector.broadcast %cst_5 : f32 to vector<8x32xf32>
    %7 = arith.mulf %6, %5 : vector<8x32xf32>
    %8 = math.sin %7 : vector<8x32xf32>
    %c0_6 = arith.constant 0 : index
    %c0_7 = arith.constant 0 : index
    %9 = vector.load %arg4[%c0_6, %c0_7] : memref<8x32xf32, #tpu.memory_space<vmem>>, vector<8x32xf32>
    tpu.vector_store %arg4[%c0_6, %c0_7], %8 {strides = array<i32>} : memref<8x32xf32, #tpu.memory_space<vmem>>, vector<8x32xf32>,
    return
  }
  func.func @transform_0(%arg0: i32) -> (i32, i32) {
    %c0_i32 = arith.constant 0 : i32
    %c0_i32_0 = arith.constant 0 : i32
    return %arg0, %c0_i32 : i32, i32
  }
  func.func @transform_1(%arg0: i32) -> (i32, i32) {
    %c0_i32 = arith.constant 0 : i32
    %c0_i32_0 = arith.constant 0 : i32
    %c0_i32_1 = arith.constant 0 : i32
    return %c0_i32, %c0_i32_0 : i32, i32
  }
  func.func @transform_2(%arg0: i32) -> (i32, i32) {
    %c0_i32 = arith.constant 0 : i32
    %c0_i32_0 = arith.constant 0 : i32
    %c0_i32_1 = arith.constant 0 : i32
    return %c0_i32, %c0_i32_0 : i32, i32
  }
  func.func @transform_3(%arg0: i32) -> (i32, i32) {
    %c0_i32 = arith.constant 0 : i32
    %c0_i32_0 = arith.constant 0 : i32
    return %arg0, %c0_i32 : i32, i32
  }
}

</mosaic_0001>

<llo_original>
// kernel: siren_forward.1
$region0: #{siren_forward.1}
  #allocation0 [shape = 'u32[]', space=smem, size = 0x4, offset = 0x4, fixed_abs, tag = 'smem constant byte address 0x4 - core index']
  #allocation1 [shape = 'u32[144,128]{1,0:T(1,128)}', space=vmem, size = 0x12000, scoped, tag = 'internal scratch']
  %s0 = inlined_call_operand.vmem [shape: f32[16,32], index: 0, kind: input, shape index: {}]
  %s1 = inlined_call_operand.vmem [shape: f32[32,32], index: 1, kind: input, shape index: {}]
  %s2 = inlined_call_operand.vmem [shape: f32[1,32], index: 2, kind: input, shape index: {}]
  %s3 = inlined_call_operand.hbm [shape: f32[16,32], index: 3, kind: output, shape index: {}]
  %s4 = sld [smem:[#allocation0]]
  $region45: #{siren_forward.1} parent=0
    _
  %s6 = ssub.s32 1, %s4
  %s7 = scalar_select 0, %s6, %s4
  $region1: #{siren_forward.1} parent=0
    #allocation2 [shape = 'u8[8192]{0}', space=vmem, size = 0x2000, scoped, tag = 'output window, operand 0']
    #allocation3 [shape = 's32[2]{0}', space=sflag, size = 0x8, scoped, tag = 'scoped memory for siren_forward.1']
    %8 = vsyncpa [#allocation3], 0
    %s9 = scalar_lea.sflag [#allocation3], 1
    %10 = vsyncpa %s9, 0
    loop: start=0, step=1, limit=4
    $region2: #{siren_forward.1} parent=1 // loop_pre_header
      _
    $region3: #{siren_forward.1} parent=1 // loop_header
      %s12 = sphi 0, %s16
      %p13 = scmp.ge.s32.totalorder %s12, 4
      %s22 = sphi 0, %s24
      %s25 = sphi 0, %s22
      %s26 = sphi 0, %s25
      %s42 = sphi 0, %s26
      %s46 = sphi 0, %s46
      %s48 = sphi 0, %s46
      %s49 = sphi 0, %s48
      %s63 = sphi 0, %s49
      %s67 = sphi 0, %s67
      %s69 = sphi 0, %s67
      %s70 = sphi 0, %s69
      %s84 = sphi 0, %s70
      %s90 = sphi 0, %s92
      %s93 = sphi 0, %s90
      %s94 = sphi 0, %s93
      %s110 = sphi 0, %s94
    $region4: #{siren_forward.1} parent=1 // loop_header_branch
      %15 = sbr.rel (%p13) target = $region8
    $region5: #{siren_forward.1} parent=1 // loop_body
      %s17 = ssub.s32 %s12, 1
      %s18 = ssub.s32 %s12, 2
      %s19 = sadd.s32 %s12, 1
      %s20 = ssub.s32 %s12, %s19
      %p21 = scmp.eq.s32.totalorder %s20, 0
      %s23 = sadd.s32 %s22, 1
      %s24 = scalar_select %p21, %s22, %s23
      %p27 = pneg %p21
      %p28 = scmp.eq.s32.totalorder %s12, 1
      %p29 = por %p27, %p28
      %p30 = scmp.ne.s32.totalorder %s22, %s25
      %p31 = scmp.eq.s32.totalorder %s12, 0
      %p32 = por %p30, %p31
      %p33 = scmp.ne.s32.totalorder %s22, %s25
      %p34 = scmp.eq.s32.totalorder %s17, 1
      %p35 = por %p33, %p34
      %p36 = scmp.ne.s32.totalorder %s25, %s26
      %p37 = scmp.eq.s32.totalorder %s17, 0
      %p38 = por %p36, %p37
      %p39 = scmp.ne.s32.totalorder %s25, %s26
      %p40 = scmp.eq.s32.totalorder %s18, 1
      %p41 = por %p39, %p40
      %p43 = scmp.ne.s32.totalorder %s26, %s42
      %p44 = scmp.eq.s32.totalorder %s18, 0
      %p45 = por %p43, %p44
      %s47 = sadd.s32 %s46, 1
      %p50 = scmp.eq.s32.totalorder %s12, 1
      %p51 = scmp.ne.s32.totalorder %s46, %s48
      %p52 = scmp.eq.s32.totalorder %s12, 0
      %p53 = por %p51, %p52
      %p54 = scmp.ne.s32.totalorder %s46, %s48
      %p55 = scmp.eq.s32.totalorder %s17, 1
      %p56 = por %p54, %p55
      %p57 = scmp.ne.s32.totalorder %s48, %s49
      %p58 = scmp.eq.s32.totalorder %s17, 0
      %p59 = por %p57, %p58
      %p60 = scmp.ne.s32.totalorder %s48, %s49
      %p61 = scmp.eq.s32.totalorder %s18, 1
      %p62 = por %p60, %p61
      %p64 = scmp.ne.s32.totalorder %s49, %s63
      %p65 = scmp.eq.s32.totalorder %s18, 0
      %p66 = por %p64, %p65
      %s68 = sadd.s32 %s67, 1
      %p71 = scmp.eq.s32.totalorder %s12, 1
      %p72 = scmp.ne.s32.totalorder %s67, %s69
      %p73 = scmp.eq.s32.totalorder %s12, 0
      %p74 = por %p72, %p73
      %p75 = scmp.ne.s32.totalorder %s67, %s69
      %p76 = scmp.eq.s32.totalorder %s17, 1
      %p77 = por %p75, %p76
      %p78 = scmp.ne.s32.totalorder %s69, %s70
      %p79 = scmp.eq.s32.totalorder %s17, 0
      %p80 = por %p78, %p79
      %p81 = scmp.ne.s32.totalorder %s69, %s70
      %p82 = scmp.eq.s32.totalorder %s18, 1
      %p83 = por %p81, %p82
      %p85 = scmp.ne.s32.totalorder %s70, %s84
      %p86 = scmp.eq.s32.totalorder %s18, 0
      %p87 = por %p85, %p86
      %s88 = ssub.s32 %s12, %s19
      %p89 = scmp.eq.s32.totalorder %s88, 0
      %s91 = sadd.s32 %s90, 1
      %s92 = scalar_select %p89, %s90, %s91
      %p95 = pneg %p89
      %p96 = scmp.eq.s32.totalorder %s12, 1
      %p97 = por %p95, %p96
      %p98 = scmp.ne.s32.totalorder %s90, %s93
      %p99 = scmp.eq.s32.totalorder %s12, 0
      %p100 = por %p98, %p99
      %p101 = scmp.ne.s32.totalorder %s90, %s93
      %p102 = scmp.eq.s32.totalorder %s17, 1
      %p103 = por %p101, %p102
      %p104 = scmp.ne.s32.totalorder %s93, %s94
      %p105 = scmp.eq.s32.totalorder %s17, 0
      %p106 = por %p104, %p105
      %p107 = scmp.ne.s32.totalorder %s93, %s94
      %p108 = scmp.eq.s32.totalorder %s18, 1
      %p109 = por %p107, %p108
      %p111 = scmp.ne.s32.totalorder %s94, %s110
      %p112 = scmp.eq.s32.totalorder %s18, 0
      %p113 = por %p111, %p112
      %p114 = scmp.le.s32.totalorder 1, %s12
      %p115 = scmp.lt.s32.totalorder %s12, 3
      %p116 = pnand %p114, %p115
      %p117 = pneg %p116
      // Predicated region
      $region9: #{siren_forward.1} parent=5 // pred_check
        _
      $region10: #{siren_forward.1} parent=5 // pred_check_branch
        %119 = sbr.rel (%p116) target = $region12
      $region11: #{siren_forward.1} parent=5 // pred_region
        %s120 = ssub.s32 %s12, 1
        // Predicated region
        $region13: #{siren_forward.1} parent=11 // pred_check
          %p121 = pneg %p59
        $region14: #{siren_forward.1} parent=11 // pred_check_branch
          %123 = sbr.rel (%p121) target = $region16
        $region15: #{siren_forward.1} parent=11 // pred_region
          _
        $region16: #{siren_forward.1} parent=11 // pred_fallthru
          _
        // Predicated region
        $region17: #{siren_forward.1} parent=11 // pred_check
          %p124 = pneg %p80
        $region18: #{siren_forward.1} parent=11 // pred_check_branch
          %126 = sbr.rel (%p124) target = $region20
        $region19: #{siren_forward.1} parent=11 // pred_region
          _
        $region20: #{siren_forward.1} parent=11 // pred_fallthru
          _
      $region12: #{siren_forward.1} parent=5 // pred_fallthru
        _
      %p127 = scmp.lt.s32.totalorder %s12, 2
      // Predicated region
      $region21: #{siren_forward.1} parent=5 // pred_check
        %p128 = pneg %p127
      $region22: #{siren_forward.1} parent=5 // pred_check_branch
        %130 = sbr.rel (%p128) target = $region24
      $region23: #{siren_forward.1} parent=5 // pred_region
        // Predicated region
        $region25: #{siren_forward.1} parent=23 // pred_check
          %p131 = pneg %p32
        $region26: #{siren_forward.1} parent=23 // pred_check_branch
          %133 = sbr.rel (%p131) target = $region28
        $region27: #{siren_forward.1} parent=23 // pred_region
          %p134 = scmp.lt.s32.totalorder %s12, 1
          %s135 = scalar_select %p134, %s12, 1
          %s136 = smul.addr %s135, 8
          %s137 = scalar_lea.vmem %s0, %s136
        $region28: #{siren_forward.1} parent=23 // pred_fallthru
          _
      $region24: #{siren_forward.1} parent=5 // pred_fallthru
        _
      %p138 = scmp.le.s32.totalorder 1, %s12
      %p139 = scmp.lt.s32.totalorder %s12, 3
      %p140 = pnand %p138, %p139
      %p141 = pneg %p140
      // Predicated region
      $region29: #{siren_forward.1} parent=5 // pred_check
        _
      $region30: #{siren_forward.1} parent=5 // pred_check_branch
        %143 = sbr.rel (%p140) target = $region32
      $region31: #{siren_forward.1} parent=5 // pred_region
        %s144 = ssub.s32 %s12, 1
        %p145 = scmp.lt.s32.totalorder %s17, 1
        %s146 = scalar_select %p145, %s17, 1
        %s147 = smul.addr %s146, 8
        %s148 = scalar_lea.vmem %s0, %s147
        %p149 = pneg %p38
        %p150 = pneg %p35
        %p151 = pneg %p59
        %p152 = pneg %p56
        %p153 = pneg %p80
        %p154 = pneg %p77
        %p155 = pneg %p106
        %p156 = pneg %p103
        %s157 = sand.u32 %s93, 1
        %s158 = scalar_lea.sflag [#allocation3], %s157
        %s159 = sand.u32 %s93, 1
        %s160 = smul.addr %s159, 8
        %s161 = scalar_lea.vmem [#allocation2], %s160
        %p162 = scmp.lt.s32.totalorder %s17, 1
        %s163 = scalar_select %p162, %s17, 1
        %s164 = smul.addr %s163, 8
        %s165 = scalar_lea.vmem %s0, %s164
        %v166 = vld [vmem:[%s165] sm:$0xff]
        %v167 = vld [vmem:[%s1] sm:$0xff]
        %v168 = vld [vmem:[%s1 + $0x8] sm:$0xff]
        %v169 = vld [vmem:[%s1 + $0x10] sm:$0xff]
        %v170 = vld [vmem:[%s1 + $0x18] sm:$0xff]
        %v171 = vld [vmem:[%s2] sm:$0x1]
        %v173 = vlaneseq
        %v174 = vshrl.u32 %v173, 7
        %v175 = vsub.s32 0, %v174
        %v176 = vrot.slane %v171, %v175
        %vm178 = vcmask 261120
        %v180 = vsel %vm178, %v166, 0
        %182 = vmatprep.subr.mxu0 0.0
        %183 = vmatpush1.msra.mxu0 0.0
        %184 = vmatprep.subr.mxu0 0.0
        %185 = vmatpush1.msra.mxu0 0.0
        %186 = vmatprep.subr.mxu0 0.0
        %187 = vmatpush1.msra.mxu0 0.0
        %188 = vmatprep.subr.mxu0 0.0
        %189 = vmatpush1.msra.mxu0 0.0
        %190 = vmatprep.subr.mxu0 0.0
        %191 = vmatpush1.msra.mxu0 0.0
        %192 = vmatprep.subr.mxu0 0.0
        %193 = vmatpush1.msra.mxu0 0.0
        %194 = vmatprep.subr.mxu0 0.0
        %195 = vmatpush1.msra.mxu0 0.0
        %196 = vmatprep.subr.mxu0 0.0
        %197 = vmatpush1.msra.mxu0 0.0
        %198 = vmatprep.subr.mxu0 0.0
        %199 = vmatpush1.msra.mxu0 0.0
        %200 = vmatprep.subr.mxu0 0.0
        %201 = vmatpush1.msra.mxu0 0.0
        %202 = vmatprep.subr.mxu0 0.0
        %203 = vmatpush1.msra.mxu0 0.0
        %204 = vmatprep.subr.mxu0 0.0
        %205 = vmatpush1.msra.mxu0 0.0
        %206 = vmatprep.subr.mxu0 0.0
        %207 = vmatpush1.msra.mxu0 %v170
        %208 = vmatprep.subr.mxu0 0.0
        %209 = vmatpush1.msra.mxu0 %v169
        %210 = vmatprep.subr.mxu0 0.0
        %211 = vmatpush1.msra.mxu0 %v168
        %212 = vmatprep.subr.mxu0 0.0
        %213 = vmatpush1.msra.mxu0 %v167
        %214 = vmatprep.subr.mxu0 0.0
        %215 = vmatpush2.msra.mxu0 0.0
        %216 = vmatprep.subr.mxu0 0.0
        %217 = vmatpush2.msra.mxu0 0.0
        %218 = vmatprep.subr.mxu0 0.0
        %219 = vmatpush2.msra.mxu0 0.0
        %220 = vmatprep.subr.mxu0 0.0
        %221 = vmatpush2.msra.mxu0 0.0
        %222 = vmatprep.subr.mxu0 0.0
        %223 = vmatpush2.msra.mxu0 0.0
        %224 = vmatprep.subr.mxu0 0.0
        %225 = vmatpush2.msra.mxu0 0.0
        %226 = vmatprep.subr.mxu0 0.0
        %227 = vmatpush2.msra.mxu0 0.0
        %228 = vmatprep.subr.mxu0 0.0
        %229 = vmatpush2.msra.mxu0 0.0
        %230 = vmatprep.subr.mxu0 0.0
        %231 = vmatpush2.msra.mxu0 0.0
        %232 = vmatprep.subr.mxu0 0.0
        %233 = vmatpush2.msra.mxu0 0.0
        %234 = vmatprep.subr.mxu0 0.0
        %235 = vmatpush2.msra.mxu0 0.0
        %236 = vmatprep.subr.mxu0 0.0
        %237 = vmatpush2.msra.mxu0 0.0
        %238 = vmatprep.subr.mxu0 0.0
        %239 = vmatpush2.msra.mxu0 0.0
        %240 = vmatprep.subr.mxu0 0.0
        %241 = vmatpush2.msra.mxu0 0.0
        %242 = vmatprep.subr.mxu0 0.0
        %243 = vmatpush2.msra.mxu0 0.0
        %244 = vmatprep.subr.mxu0 0.0
        %245 = vmatpush2.msra.mxu0 0.0
        %246 = vmatprep.mubr.f32.mxu0 0.0
        %247 = vmatmul.mubr.f32.gmra.mxu0 %v180
        %v248 = vpop.f32.mrf.mxu0
        %v249 = vadd.f32 %v176, %v248
        %v250 = vpop.f32.mrf.mxu0
        %251 = vdwg.mxu0
        %v252 = vmul.f32 %v249, 30.0
        %v253 = vand.u32 2147483647, %v252
        %vm254 = vcmp.le.f32.partialorder %v253, 0.7853982
        %vm255 = vcmp.lt.s32.totalorder %v252, 0
        %v256 = vand.u32 %v252, 2139095040
        %v257 = vshrl.u32 %v256, 23
        %v258 = vsub.s32 %v257, 127
        %v259 = vand.u32 2147483647, %v252
        %v260 = vand.u32 %v259, 8388607
        %v261 = vor.u32 %v260, 8388608
        %v262 = vsub.s32 0, %v261
        %v263 = vadd.s32 %v258, 1
        %vm264 = vcmp.gt.s32.totalorder %v263, 0
        %v265 = vsel %vm264, %v263, 0
        %v266 = vshrl.u32 %v265, 5
        %v267 = vand.u32 %v265, 31
        %v268 = vsub.s32 32, %v267
        %v269 = vshrl.u32 683565275, %v268
        %v270 = vshll.u32 683565275, %v267
        %v271 = vshrl.u32 2475754826, %v268
        %v272 = vor.u32 %v270, %v271
        %v273 = vshll.u32 2475754826, %v267
        %v274 = vshrl.u32 2131351028, %v268
        %v275 = vor.u32 %v273, %v274
        %v276 = vshll.u32 2131351028, %v267
        %v277 = vshrl.u32 2102212464, %v268
        %v278 = vor.u32 %v276, %v277
        %v279 = vshll.u32 2102212464, %v267
        %v280 = vshrl.u32 920167782, %v268
        %v281 = vor.u32 %v279, %v280
        %v282 = vshll.u32 920167782, %v267
        %v283 = vshrl.u32 1326507024, %v268
        %v284 = vor.u32 %v282, %v283
        %vm285 = vcmp.lt.s32.totalorder %v266, 1
        %vm286 = vcmp.lt.s32.totalorder %v266, 2
        %vm287 = vcmp.lt.s32.totalorder %v266, 3
        %vm288 = vcmp.lt.s32.totalorder %v266, 4
        %v289 = vsel %vm285, %v269, %v272
        %v290 = vsel %vm288, %v278, 2102212464
        %v291 = vsel %vm287, %v275, %v290
        %v292 = vsel %vm286, %v289, %v291
        %v293 = vsel %vm285, %v272, %v275
        %v294 = vsel %vm288, %v281, 920167782
        %v295 = vsel %vm287, %v278, %v294
        %v296 = vsel %vm286, %v293, %v295
        %v297 = vsel %vm285, %v275, %v278
        %v298 = vsel %vm288, %v284, 1326507024
        %v299 = vsel %vm287, %v281, %v298
        %v300 = vsel %vm286, %v297, %v299
        %v301 = vshll.u32 %v261, 8
        %v302 = vmul.u32.u64.compose %v301, %v300
        %v303 = vextract.low.u32 %v302
        %v304 = vextract.high.u32 %v302
        %v305 = vmul.u32.u64.compose %v301, %v296
        %v306 = vextract.low.u32 %v305
        %v307 = vextract.high.u32 %v305
        %v308 = vmul.u32 %v301, %v292
        %v309 = vadd.s32 %v304, %v306
        %vm310 = vc.u32 %v304, %v306
        %v311 = vadd.s32 %v307, 1
        %v312 = vsel %vm310, %v311, %v307
        %v313 = vadd.s32 %v308, %v312
        %v314 = vadd.s32 %v313, 536870912
        %v315 = vshrl.u32 %v314, 30
        %v316 = vshll.u32 %v315, 30
        %v317 = vsub.s32 %v313, %v316
        %vm318 = vcmp.lt.s32.totalorder %v317, 0
        %v319 = vsub.s32 0, %v317
        %v320 = vsel %vm318, %v319, %v317
        %v321 = vclz %v320
        %v322 = vsub.s32 %v321, 2
        %vm323 = vcmp.gt.s32.totalorder 0, %v322
        %v324 = vsel %vm323, 0, %v322
        %v325 = vsub.s32 32, %v324
        %v326 = vshll.u32 %v317, %v324
        %v327 = vshrl.u32 %v309, %v325
        %v328 = vor.u32 %v326, %v327
        %v329 = vsub.s32 4294967266, %v324
        %v330 = vadd.s32 %v329, 127
        %v331 = vshll.u32 %v330, 23
        %v332 = vor.u32 4788187, %v331
        %v333 = vand.u32 2147483647, %v332
        %v335 = vcvt.s32.f32 %v328
        %v336 = vmul.f32 %v335, %v333
        %v337 = vxor.u32 %v336, 2147483648
        %v338 = vsel %vm255, %v337, %v336
        %v339 = vsub.s32 4, %v315
        %v340 = vsel %vm255, %v339, %v315
        %v341 = vsel %vm254, %v252, %v338
        %v342 = vsel %vm254, 0, %v340
        %v343 = vcosq.f32.pop %v341
        %v344 = vsinq.f32.pop %v341
        %vm345 = vweird.f32 %v252
        %v346 = vadd.s32 %v342, 3
        %v347 = vand.u32 %v346, 3
        %vm348 = vcmp.lt.s32.totalorder %v347, 2
        %vm349 = vcmp.eq.s32.totalorder %v347, 0
        %v350 = vxor.u32 %v344, 2147483648
        %v351 = vsel %vm349, %v343, %v350
        %vm352 = vcmp.eq.s32.totalorder %v347, 2
        %v353 = vxor.u32 %v343, 2147483648
        %v354 = vsel %vm352, %v353, %v344
        %v355 = vsel %vm348, %v351, %v354
        %v356 = vsel %vm345, nan, %v355
        %357 = vst.msk [vmem:[%s161] sm:$0xff] %vm178, %v356
        %s358 = sand.u32 %s93, 1
        %s359 = scalar_lea.sflag [#allocation3], %s358
        %s360 = sand.u32 %s93, 1
        %s361 = smul.addr %s360, 8
        %s362 = scalar_lea.vmem [#allocation2], %s361
        // Predicated region
        $region33: #{siren_forward.1} parent=31 // pred_check
          %p363 = pneg %p103
        $region34: #{siren_forward.1} parent=31 // pred_check_branch
          %365 = sbr.rel (%p363) target = $region36
        $region35: #{siren_forward.1} parent=31 // pred_region
          %s367 = ssub.s32 128, 128
          %368 = vsyncadd %s359, %s367
          %s369 = smul.addr %s17, 128
          %s370 = scalar_lea.hbm %s3, %s369
          %s372 = sshll.u32 %s362, 4
          %s373 = int_to_ptr.vmem [resolvable:$true] %s372
          %375 = dma.vmem_to_hbm [thread:$0]  %s373, 128, %s370, %s359
        $region36: #{siren_forward.1} parent=31 // pred_fallthru
          _
      $region32: #{siren_forward.1} parent=5 // pred_fallthru
        _
      %p376 = scmp.le.s32.totalorder 2, %s12
      // Predicated region
      $region37: #{siren_forward.1} parent=5 // pred_check
        %p377 = pneg %p376
      $region38: #{siren_forward.1} parent=5 // pred_check_branch
        %379 = sbr.rel (%p377) target = $region40
      $region39: #{siren_forward.1} parent=5 // pred_region
        %s380 = ssub.s32 %s12, 2
        // Predicated region
        $region41: #{siren_forward.1} parent=39 // pred_check
          %p381 = pneg %p109
        $region42: #{siren_forward.1} parent=39 // pred_check_branch
          %383 = sbr.rel (%p381) target = $region44
        $region43: #{siren_forward.1} parent=39 // pred_region
          %s384 = sand.u32 %s94, 1
          %s385 = scalar_lea.sflag [#allocation3], %s384
          %s386 = sand.u32 %s94, 1
          %s387 = smul.addr %s386, 8
          %s388 = scalar_lea.vmem [#allocation2], %s387
          %389 = dma.done %s385, 128
        $region44: #{siren_forward.1} parent=39 // pred_fallthru
          _
      $region40: #{siren_forward.1} parent=5 // pred_fallthru
        _
    $region6: #{siren_forward.1} parent=1 // loop_footer
      %s16 = sadd.s32 1, %s12
    $region7: #{siren_forward.1} parent=1 // loop_footer_branch
      %11 = sbr.rel target = $region3
    $region8: #{siren_forward.1} parent=1 // loop_exit
      _
    %390 = vsyncpa [#allocation3], 1
    %s391 = scalar_lea.sflag [#allocation3], 1
    %392 = vsyncpa %s391, 1

</llo_original>
